<compile_context>
chip_gen: v6e
topology: v6e:2x2x1
jax: 0.10.0
libtpu: 0.0.40
codegen_flags: <defaults>
</compile_context>

<pallas_src>
import jax
import jax.numpy as jnp
from jax.experimental import pallas as pl
from jax.experimental.pallas import tpu as pltpu

DROPOUT = 0.2
N_EMBD = 192
HIDDEN = 4 * N_EMBD  # 768
TILE_M = 512         # rows per grid step (multiple of 16; ~1.2 MiB tile footprint)


def _mlp_eval_kernel(x_ref, w1_ref, b1_ref, w2_ref, b2_ref, o_ref):
    # Two bf16 MXU matmuls with f32 accumulation; bias + ReLU fused in VMEM.
    x = x_ref[...]                                                    # (TM, 192) bf16
    h = jnp.dot(x, w1_ref[...], preferred_element_type=jnp.float32) + b1_ref[...]
    h = jnp.maximum(h, 0.0)                                           # (TM, 768) f32
    y = jnp.dot(h.astype(jnp.bfloat16), w2_ref[...],
                preferred_element_type=jnp.float32) + b2_ref[...]     # (TM, 192) f32
    # Dropout is identity in eval mode (PyTorch nn.Dropout, training=False).
    o_ref[...] = y.astype(o_ref.dtype)


def _mlp_train_kernel(x_ref, w1_ref, b1_ref, w2_ref, b2_ref, mask_ref, o_ref):
    x = x_ref[...]
    h = jnp.dot(x, w1_ref[...], preferred_element_type=jnp.float32) + b1_ref[...]
    h = jnp.maximum(h, 0.0)
    y = jnp.dot(h.astype(jnp.bfloat16), w2_ref[...],
                preferred_element_type=jnp.float32) + b2_ref[...]
    # Inverted dropout: mask is already 0 or 1/(1-p) (bf16) -> one fused multiply.
    o_ref[...] = (y * mask_ref[...].astype(jnp.float32)).astype(o_ref.dtype)


def _round_up(x, n):
    return ((x + n - 1) // n) * n


def simple_nn_forward(x, params, *, training=False, seed=0, tile_m=TILE_M):
    """x: [..., N_EMBD] float32.  Returns the same shape (float32)."""
    w1, b1, w2, b2 = params
    orig_shape = x.shape
    m = 1
    for d in orig_shape[:-1]:
        m *= d

    # bf16 activations for the MXU (also halves the x DMA bytes).
    x2d = x.reshape(m, N_EMBD).astype(jnp.bfloat16)

    # Row tile: multiple of 16, capped at tile_m; pad m up to a whole number of tiles.
    tm = min(tile_m, _round_up(m, 16))
    m_pad = _round_up(m, tm)
    if m_pad != m:
        x2d = jnp.pad(x2d, ((0, m_pad - m), (0, 0)))
    num_tiles = m_pad // tm

    out_shape = jax.ShapeDtypeStruct((m_pad, N_EMBD), jnp.float32)
    compiler_params = pltpu.CompilerParams(dimension_semantics=("parallel",))

    x_spec = pl.BlockSpec((tm, N_EMBD), lambda i: (i, 0))       # x tile
    o_spec = pl.BlockSpec((tm, N_EMBD), lambda i: (i, 0))       # out tile
    w_specs = [
        pl.BlockSpec((N_EMBD, HIDDEN), lambda i: (0, 0)),       # w1 (resident)
        pl.BlockSpec((1, HIDDEN), lambda i: (0, 0)),            # b1
        pl.BlockSpec((HIDDEN, N_EMBD), lambda i: (0, 0)),       # w2 (resident)
        pl.BlockSpec((1, N_EMBD), lambda i: (0, 0)),            # b2
    ]

    if not training:
        y2d = pl.pallas_call(
            _mlp_eval_kernel,
            out_shape=out_shape,
            grid_spec=pl.GridSpec(
                grid=(num_tiles,),
                in_specs=[x_spec] + w_specs,
                out_specs=o_spec,
            ),
            compiler_params=compiler_params,
        )(x2d, w1, b1, w2, b2)
    else:
        # Pre-scaled keep mask: 0 where dropped, 1/(1-p) where kept (bf16, exact).
        keep = jax.random.bernoulli(jax.random.PRNGKey(seed),
                                    p=1.0 - DROPOUT, shape=(m_pad, N_EMBD))
        mask = keep.astype(jnp.bfloat16) * jnp.bfloat16(1.0 / (1.0 - DROPOUT))
        mask_spec = pl.BlockSpec((tm, N_EMBD), lambda i: (i, 0))
        y2d = pl.pallas_call(
            _mlp_train_kernel,
            out_shape=out_shape,
            grid_spec=pl.GridSpec(
                grid=(num_tiles,),
                in_specs=[x_spec] + w_specs + [mask_spec],
                out_specs=o_spec,
            ),
            compiler_params=compiler_params,
        )(x2d, w1, b1, w2, b2, mask)

    return y2d[:m].reshape(orig_shape)


def init_params(key):
    """Mirror PyTorch nn.Linear default init (uniform +-1/sqrt(fan_in)).
    Weights are stored pre-transposed to [in, out]; weights bf16, biases f32."""
    k1, k2, k3, k4 = jax.random.split(key, 4)
    lim1 = 1.0 / (N_EMBD ** 0.5)
    lim2 = 1.0 / (HIDDEN ** 0.5)
    w1 = jax.random.uniform(k1, (N_EMBD, HIDDEN), jnp.float32, -lim1, lim1)
    b1 = jax.random.uniform(k2, (1, HIDDEN), jnp.float32, -lim1, lim1)
    w2 = jax.random.uniform(k3, (HIDDEN, N_EMBD), jnp.float32, -lim2, lim2)
    b2 = jax.random.uniform(k4, (1, N_EMBD), jnp.float32, -lim2, lim2)
    return w1.astype(jnp.bfloat16), b1, w2.astype(jnp.bfloat16), b2


if __name__ == "__main__":
    key = jax.random.PRNGKey(0)
    pkey, xkey = jax.random.split(key)
    params = init_params(pkey)
    w1, b1, w2, b2 = params

    # small input consistent with the module: batch=2, seq=8, features=n_embd=192
    x = jax.random.normal(xkey, (2, 8, N_EMBD), jnp.float32)

    # ---- eval-mode forward (dropout = identity), matching module.eval() ----
    y = simple_nn_forward(x, params, training=False)
    y = jax.block_until_ready(y)

    # plain-JAX reference with the same bf16-operand / f32-accumulate recipe
    xb = x.reshape(-1, N_EMBD).astype(jnp.bfloat16)
    h_ref = jnp.dot(xb, w1, preferred_element_type=jnp.float32) + b1
    h_ref = jnp.maximum(h_ref, 0.0)
    ref = jnp.dot(h_ref.astype(jnp.bfloat16), w2,
                  preferred_element_type=jnp.float32) + b2
    ref = ref.reshape(x.shape)
    assert jnp.allclose(y, ref, atol=1e-2, rtol=1e-2), "eval output mismatch"

    # ---- train-mode forward (exercises fused dropout path) ----
    y_tr = simple_nn_forward(x, params, training=True, seed=123)
    y_tr = jax.block_until_ready(y_tr)
    assert y_tr.shape == x.shape
    assert bool(jnp.all(jnp.isfinite(y_tr)))
    zero_frac = float(jnp.mean((y_tr == 0.0).astype(jnp.float32)))
    assert 0.10 < zero_frac < 0.30, f"dropout rate off: {zero_frac}"

    print("KERNEL_OK")
</pallas_src>

<mosaic_0001>
module attributes {stable_mosaic.version = 11 : i64} {
  func.func @_mlp_eval_kernel(%arg0: i32, %arg1: memref<16x192xbf16, #tpu.memory_space<vmem>>, %arg2: memref<192x768xbf16, #tpu.memory_space<vmem>>, %arg3: memref<1x768xf32, #tpu.memory_space<vmem>>, %arg4: memref<768x192xbf16, #tpu.memory_space<vmem>>, %arg5: memref<1x192xf32, #tpu.memory_space<vmem>>, %arg6: memref<16x192xf32, #tpu.memory_space<vmem>>) attributes {dimension_semantics = [#tpu.dimension_semantics<parallel>], iteration_bounds = array<i64: 1>, scalar_prefetch = 0 : i64, scratch_operands = 0 : i64, tpu.core_type = #tpu.core_type<tc>, window_params = [{transform_indices = @transform_0, window_bounds = array<i64: 16, 192>}, {pipeline_mode = #tpu.pipeline_mode<synchronous>, transform_indices = @transform_1, window_bounds = array<i64: 192, 768>}, {pipeline_mode = #tpu.pipeline_mode<synchronous>, transform_indices = @transform_2, window_bounds = array<i64: 1, 768>}, {pipeline_mode = #tpu.pipeline_mode<synchronous>, transform_indices = @transform_3, window_bounds = array<i64: 768, 192>}, {pipeline_mode = #tpu.pipeline_mode<synchronous>, transform_indices = @transform_4, window_bounds = array<i64: 1, 192>}, {transform_indices = @transform_5, window_bounds = array<i64: 16, 192>}]} {
    %c0 = arith.constant 0 : index
    %c0_0 = arith.constant 0 : index
    %0 = vector.load %arg1[%c0, %c0_0] : memref<16x192xbf16, #tpu.memory_space<vmem>>, vector<16x192xbf16>
    %c0_1 = arith.constant 0 : index
    %c0_2 = arith.constant 0 : index
    %1 = vector.load %arg2[%c0_1, %c0_2] : memref<192x768xbf16, #tpu.memory_space<vmem>>, vector<192x768xbf16>
    %cst = arith.constant dense<0.000000e+00> : vector<16x768xf32>
    %2 = tpu.matmul %0, %1, %cst {dimension_numbers = #tpu.dot_dimension_numbers<[1], [0], [0], [1], [0, 0, 1, 1], [], []>} : vector<16x192xbf16>, vector<192x768xbf16>, vector<16x768xf32> -> vector<16x768xf32>
    %c0_3 = arith.constant 0 : index
    %c0_4 = arith.constant 0 : index
    %3 = vector.load %arg3[%c0_3, %c0_4] : memref<1x768xf32, #tpu.memory_space<vmem>>, vector<1x768xf32>
    %4 = vector.broadcast %3 : vector<1x768xf32> to vector<16x768xf32>
    %5 = arith.addf %2, %4 : vector<16x768xf32>
    %cst_5 = arith.constant 0.000000e+00 : f32
    %6 = vector.broadcast %cst_5 : f32 to vector<16x768xf32>
    %7 = arith.maximumf %5, %6 : vector<16x768xf32>
    %8 = arith.truncf %7 : vector<16x768xf32> to vector<16x768xbf16>
    %c0_6 = arith.constant 0 : index
    %c0_7 = arith.constant 0 : index
    %9 = vector.load %arg4[%c0_6, %c0_7] : memref<768x192xbf16, #tpu.memory_space<vmem>>, vector<768x192xbf16>
    %cst_8 = arith.constant dense<0.000000e+00> : vector<16x192xf32>
    %10 = tpu.matmul %8, %9, %cst_8 {dimension_numbers = #tpu.dot_dimension_numbers<[1], [0], [0], [1], [0, 0, 1, 1], [], []>} : vector<16x768xbf16>, vector<768x192xbf16>, vector<16x192xf32> -> vector<16x192xf32>
    %c0_9 = arith.constant 0 : index
    %c0_10 = arith.constant 0 : index
    %11 = vector.load %arg5[%c0_9, %c0_10] : memref<1x192xf32, #tpu.memory_space<vmem>>, vector<1x192xf32>
    %12 = vector.broadcast %11 : vector<1x192xf32> to vector<16x192xf32>
    %13 = arith.addf %10, %12 : vector<16x192xf32>
    %c0_11 = arith.constant 0 : index
    %c0_12 = arith.constant 0 : index
    %14 = vector.load %arg6[%c0_11, %c0_12] : memref<16x192xf32, #tpu.memory_space<vmem>>, vector<16x192xf32>
    tpu.vector_store %arg6[%c0_11, %c0_12], %13 {strides = array<i32>} : memref<16x192xf32, #tpu.memory_space<vmem>>, vector<16x192xf32>,
    return
  }
  func.func @transform_0(%arg0: i32) -> (i32, i32) {
    %c0_i32 = arith.constant 0 : i32
    %c0_i32_0 = arith.constant 0 : i32
    return %arg0, %c0_i32 : i32, i32
  }
  func.func @transform_1(%arg0: i32) -> (i32, i32) {
    %c0_i32 = arith.constant 0 : i32
    %c0_i32_0 = arith.constant 0 : i32
    %c0_i32_1 = arith.constant 0 : i32
    return %c0_i32, %c0_i32_0 : i32, i32
  }
  func.func @transform_2(%arg0: i32) -> (i32, i32) {
    %c0_i32 = arith.constant 0 : i32
    %c0_i32_0 = arith.constant 0 : i32
    %c0_i32_1 = arith.constant 0 : i32
    return %c0_i32, %c0_i32_0 : i32, i32
  }
  func.func @transform_3(%arg0: i32) -> (i32, i32) {
    %c0_i32 = arith.constant 0 : i32
    %c0_i32_0 = arith.constant 0 : i32
    %c0_i32_1 = arith.constant 0 : i32
    return %c0_i32, %c0_i32_0 : i32, i32
  }
  func.func @transform_4(%arg0: i32) -> (i32, i32) {
    %c0_i32 = arith.constant 0 : i32
    %c0_i32_0 = arith.constant 0 : i32
    %c0_i32_1 = arith.constant 0 : i32
    return %c0_i32, %c0_i32_0 : i32, i32
  }
  func.func @transform_5(%arg0: i32) -> (i32, i32) {
    %c0_i32 = arith.constant 0 : i32
    %c0_i32_0 = arith.constant 0 : i32
    return %arg0, %c0_i32 : i32, i32
  }
}

</mosaic_0001>

<llo_original>
// kernel: tpu_custom_call.1
$region0: #{tpu_custom_call.1}
  #allocation0 [shape = 'u32[]', space=smem, size = 0x4, offset = 0x4, fixed_abs, tag = 'smem constant byte address 0x4 - core index']
  #allocation1 [shape = 'u32[144,128]{1,0:T(1,128)}', space=vmem, size = 0x12000, scoped, tag = 'internal scratch']
  %s0 = inlined_call_operand.vmem [shape: bf16[16,192], index: 0, kind: input, shape index: {}]
  %s1 = inlined_call_operand.vmem [shape: bf16[192,768], index: 1, kind: input, shape index: {}]
  %s2 = inlined_call_operand.vmem [shape: f32[1,768], index: 2, kind: input, shape index: {}]
  %s3 = inlined_call_operand.vmem [shape: bf16[768,192], index: 3, kind: input, shape index: {}]
  %s4 = inlined_call_operand.vmem [shape: f32[1,192], index: 4, kind: input, shape index: {}]
  %s5 = inlined_call_operand.hbm [shape: f32[16,192], index: 5, kind: output, shape index: {}]
  %s6 = sld [smem:[#allocation0]]
  $region30: #{tpu_custom_call.1} parent=0
    _
  %s8 = ssub.s32 1, %s6
  %s9 = scalar_select 0, %s8, %s6
  $region1: #{tpu_custom_call.1} parent=0
    #allocation2 [shape = 'u8[16384]{0}', space=vmem, size = 0x4000, scoped, tag = 'output window, operand 0, single buffered']
    #allocation3 [shape = 's32[1]{0}', space=sflag, size = 0x4, scoped, tag = 'scoped memory for tpu_custom_call.1']
    %10 = vsyncpa [#allocation3], 0
    // Predicated region
    $region2: #{tpu_custom_call.1} parent=1 // pred_check
      _
    $region3: #{tpu_custom_call.1} parent=1 // pred_check_branch
      %12 = sbr.rel (0) target = $region5
    $region4: #{tpu_custom_call.1} parent=1 // pred_region
      _
    $region5: #{tpu_custom_call.1} parent=1 // pred_fallthru
      _
    // Predicated region
    $region6: #{tpu_custom_call.1} parent=1 // pred_check
      _
    $region7: #{tpu_custom_call.1} parent=1 // pred_check_branch
      %14 = sbr.rel (0) target = $region9
    $region8: #{tpu_custom_call.1} parent=1 // pred_region
      _
    $region9: #{tpu_custom_call.1} parent=1 // pred_fallthru
      _
    // Predicated region
    $region10: #{tpu_custom_call.1} parent=1 // pred_check
      _
    $region11: #{tpu_custom_call.1} parent=1 // pred_check_branch
      %16 = sbr.rel (0) target = $region13
    $region12: #{tpu_custom_call.1} parent=1 // pred_region
      _
    $region13: #{tpu_custom_call.1} parent=1 // pred_fallthru
      _
    // Predicated region
    $region14: #{tpu_custom_call.1} parent=1 // pred_check
      _
    $region15: #{tpu_custom_call.1} parent=1 // pred_check_branch
      %18 = sbr.rel (0) target = $region17
    $region16: #{tpu_custom_call.1} parent=1 // pred_region
      _
    $region17: #{tpu_custom_call.1} parent=1 // pred_fallthru
      _
    // Predicated region
    $region18: #{tpu_custom_call.1} parent=1 // pred_check
      _
    $region19: #{tpu_custom_call.1} parent=1 // pred_check_branch
      %20 = sbr.rel (0) target = $region21
    $region20: #{tpu_custom_call.1} parent=1 // pred_region
      _
    $region21: #{tpu_custom_call.1} parent=1 // pred_fallthru
      _
    %v22 = vld [vmem:[%s0] sm:$0xff]
    %v23 = vld [vmem:[%s0 + $0x8] sm:$0xff]
    %v24 = vld [vmem:[%s1] sm:$0xff]
    %v25 = vld [vmem:[%s1 + $0x8] sm:$0xff]
    %v26 = vld [vmem:[%s1 + $0x10] sm:$0xff]
    %v27 = vld [vmem:[%s1 + $0x18] sm:$0xff]
    %v28 = vld [vmem:[%s1 + $0x20] sm:$0xff]
    %v29 = vld [vmem:[%s1 + $0x28] sm:$0xff]
    %v30 = vld [vmem:[%s1 + $0x30] sm:$0xff]
    %v31 = vld [vmem:[%s1 + $0x38] sm:$0xff]
    %v32 = vld [vmem:[%s1 + $0x40] sm:$0xff]
    %v33 = vld [vmem:[%s1 + $0x48] sm:$0xff]
    %v34 = vld [vmem:[%s1 + $0x50] sm:$0xff]
    %v35 = vld [vmem:[%s1 + $0x58] sm:$0xff]
    %v36 = vld [vmem:[%s1 + $0x60] sm:$0xff]
    %v37 = vld [vmem:[%s1 + $0x68] sm:$0xff]
    %v38 = vld [vmem:[%s1 + $0x70] sm:$0xff]
    %v39 = vld [vmem:[%s1 + $0x78] sm:$0xff]
    %v40 = vld [vmem:[%s1 + $0x80] sm:$0xff]
    %v41 = vld [vmem:[%s1 + $0x88] sm:$0xff]
    %v42 = vld [vmem:[%s1 + $0x90] sm:$0xff]
    %v43 = vld [vmem:[%s1 + $0x98] sm:$0xff]
    %v44 = vld [vmem:[%s1 + $0xa0] sm:$0xff]
    %v45 = vld [vmem:[%s1 + $0xa8] sm:$0xff]
    %v46 = vld [vmem:[%s1 + $0xb0] sm:$0xff]
    %v47 = vld [vmem:[%s1 + $0xb8] sm:$0xff]
    %v48 = vld [vmem:[%s1 + $0xc0] sm:$0xff]
    %v49 = vld [vmem:[%s1 + $0xc8] sm:$0xff]
    %v50 = vld [vmem:[%s1 + $0xd0] sm:$0xff]
    %v51 = vld [vmem:[%s1 + $0xd8] sm:$0xff]
    %v52 = vld [vmem:[%s1 + $0xe0] sm:$0xff]
    %v53 = vld [vmem:[%s1 + $0xe8] sm:$0xff]
    %v54 = vld [vmem:[%s1 + $0xf0] sm:$0xff]
    %v55 = vld [vmem:[%s1 + $0xf8] sm:$0xff]
    %v56 = vld [vmem:[%s1 + $0x100] sm:$0xff]
    %v57 = vld [vmem:[%s1 + $0x108] sm:$0xff]
    %v58 = vld [vmem:[%s1 + $0x110] sm:$0xff]
    %v59 = vld [vmem:[%s1 + $0x118] sm:$0xff]
    %v60 = vld [vmem:[%s1 + $0x120] sm:$0xff]
    %v61 = vld [vmem:[%s1 + $0x128] sm:$0xff]
    %v62 = vld [vmem:[%s1 + $0x130] sm:$0xff]
    %v63 = vld [vmem:[%s1 + $0x138] sm:$0xff]
    %v64 = vld [vmem:[%s1 + $0x140] sm:$0xff]
    %v65 = vld [vmem:[%s1 + $0x148] sm:$0xff]
    %v66 = vld [vmem:[%s1 + $0x150] sm:$0xff]
    %v67 = vld [vmem:[%s1 + $0x158] sm:$0xff]
    %v68 = vld [vmem:[%s1 + $0x160] sm:$0xff]
    %v69 = vld [vmem:[%s1 + $0x168] sm:$0xff]
    %v70 = vld [vmem:[%s1 + $0x170] sm:$0xff]
    %v71 = vld [vmem:[%s1 + $0x178] sm:$0xff]
    %v72 = vld [vmem:[%s1 + $0x180] sm:$0xff]
    %v73 = vld [vmem:[%s1 + $0x188] sm:$0xff]
    %v74 = vld [vmem:[%s1 + $0x190] sm:$0xff]
    %v75 = vld [vmem:[%s1 + $0x198] sm:$0xff]
    %v76 = vld [vmem:[%s1 + $0x1a0] sm:$0xff]
    %v77 = vld [vmem:[%s1 + $0x1a8] sm:$0xff]
    %v78 = vld [vmem:[%s1 + $0x1b0] sm:$0xff]
    %v79 = vld [vmem:[%s1 + $0x1b8] sm:$0xff]
    %v80 = vld [vmem:[%s1 + $0x1c0] sm:$0xff]
    %v81 = vld [vmem:[%s1 + $0x1c8] sm:$0xff]
    %v82 = vld [vmem:[%s1 + $0x1d0] sm:$0xff]
    %v83 = vld [vmem:[%s1 + $0x1d8] sm:$0xff]
    %v84 = vld [vmem:[%s1 + $0x1e0] sm:$0xff]
    %v85 = vld [vmem:[%s1 + $0x1e8] sm:$0xff]
    %v86 = vld [vmem:[%s1 + $0x1f0] sm:$0xff]
    %v87 = vld [vmem:[%s1 + $0x1f8] sm:$0xff]
    %v88 = vld [vmem:[%s1 + $0x200] sm:$0xff]
    %v89 = vld [vmem:[%s1 + $0x208] sm:$0xff]
    %v90 = vld [vmem:[%s1 + $0x210] sm:$0xff]
    %v91 = vld [vmem:[%s1 + $0x218] sm:$0xff]
    %v92 = vld [vmem:[%s1 + $0x220] sm:$0xff]
    %v93 = vld [vmem:[%s1 + $0x228] sm:$0xff]
    %v94 = vld [vmem:[%s1 + $0x230] sm:$0xff]
    %v95 = vld [vmem:[%s1 + $0x238] sm:$0xff]
    %v96 = vld [vmem:[%s2] sm:$0x3f]
    %v98 = vlaneseq
    %v99 = vshrl.u32 %v98, 7
    %v100 = vsub.s32 0, %v99
    %v101 = vrot.slane %v96, %v100
    %v102 = vlaneseq
    %v103 = vshrl.u32 %v102, 7
    %v104 = vsub.s32 1, %v103
    %v105 = vrot.slane %v96, %v104
    %v106 = vlaneseq
    %v107 = vshrl.u32 %v106, 7
    %v108 = vsub.s32 2, %v107
    %v109 = vrot.slane %v96, %v108
    %v110 = vlaneseq
    %v111 = vshrl.u32 %v110, 7
    %v112 = vsub.s32 3, %v111
    %v113 = vrot.slane %v96, %v112
    %v114 = vlaneseq
    %v115 = vshrl.u32 %v114, 7
    %v116 = vsub.s32 4, %v115
    %v117 = vrot.slane %v96, %v116
    %v118 = vlaneseq
    %v119 = vshrl.u32 %v118, 7
    %v120 = vsub.s32 5, %v119
    %v121 = vrot.slane %v96, %v120
    %v130 = vunpack.c.l.b16 %v22
    %v131 = vunpack.c.h.b16 %v22
    %v132 = vunpack.c.l.b16 %v23
    %v133 = vunpack.c.h.b16 %v23
    %v134 = vpack.c.b16 %v132, %v130
    %v135 = vpack.c.b16 %v133, %v131
    %v209 = vunpack.c.l.b16 %v24
    %v210 = vunpack.c.h.b16 %v24
    %v211 = vunpack.c.l.b16 %v25
    %v212 = vunpack.c.h.b16 %v25
    %v213 = vunpack.c.l.b16 %v26
    %v214 = vunpack.c.h.b16 %v26
    %v215 = vunpack.c.l.b16 %v27
    %v216 = vunpack.c.h.b16 %v27
    %v217 = vunpack.c.l.b16 %v28
    %v218 = vunpack.c.h.b16 %v28
    %v219 = vunpack.c.l.b16 %v29
    %v220 = vunpack.c.h.b16 %v29
    %v221 = vunpack.c.l.b16 %v30
    %v222 = vunpack.c.h.b16 %v30
    %v223 = vunpack.c.l.b16 %v31
    %v224 = vunpack.c.h.b16 %v31
    %v225 = vunpack.c.l.b16 %v32
    %v226 = vunpack.c.h.b16 %v32
    %v227 = vunpack.c.l.b16 %v33
    %v228 = vunpack.c.h.b16 %v33
    %v229 = vunpack.c.l.b16 %v34
    %v230 = vunpack.c.h.b16 %v34
    %v231 = vunpack.c.l.b16 %v35
    %v232 = vunpack.c.h.b16 %v35
    %v233 = vunpack.c.l.b16 %v36
    %v234 = vunpack.c.h.b16 %v36
    %v235 = vunpack.c.l.b16 %v37
    %v236 = vunpack.c.h.b16 %v37
    %v237 = vunpack.c.l.b16 %v38
    %v238 = vunpack.c.h.b16 %v38
    %v239 = vunpack.c.l.b16 %v39
    %v240 = vunpack.c.h.b16 %v39
    %v241 = vunpack.c.l.b16 %v40
    %v242 = vunpack.c.h.b16 %v40
    %v243 = vunpack.c.l.b16 %v41
    %v244 = vunpack.c.h.b16 %v41
    %v245 = vunpack.c.l.b16 %v42
    %v246 = vunpack.c.h.b16 %v42
    %v247 = vunpack.c.l.b16 %v43
    %v248 = vunpack.c.h.b16 %v43
    %v249 = vunpack.c.l.b16 %v44
    %v250 = vunpack.c.h.b16 %v44
    %v251 = vunpack.c.l.b16 %v45
    %v252 = vunpack.c.h.b16 %v45
    %v253 = vunpack.c.l.b16 %v46
    %v254 = vunpack.c.h.b16 %v46
    %v255 = vunpack.c.l.b16 %v47
    %v256 = vunpack.c.h.b16 %v47
    %v257 = vunpack.c.l.b16 %v48
    %v258 = vunpack.c.h.b16 %v48
    %v259 = vunpack.c.l.b16 %v49
    %v260 = vunpack.c.h.b16 %v49
    %v261 = vunpack.c.l.b16 %v50
    %v262 = vunpack.c.h.b16 %v50
    %v263 = vunpack.c.l.b16 %v51
    %v264 = vunpack.c.h.b16 %v51
    %v265 = vunpack.c.l.b16 %v52
    %v266 = vunpack.c.h.b16 %v52
    %v267 = vunpack.c.l.b16 %v53
    %v268 = vunpack.c.h.b16 %v53
    %v269 = vunpack.c.l.b16 %v54
    %v270 = vunpack.c.h.b16 %v54
    %v271 = vunpack.c.l.b16 %v55
    %v272 = vunpack.c.h.b16 %v55
    %v273 = vunpack.c.l.b16 %v56
    %v274 = vunpack.c.h.b16 %v56
    %v275 = vunpack.c.l.b16 %v57
    %v276 = vunpack.c.h.b16 %v57
    %v277 = vunpack.c.l.b16 %v58
    %v278 = vunpack.c.h.b16 %v58
    %v279 = vunpack.c.l.b16 %v59
    %v280 = vunpack.c.h.b16 %v59
    %v281 = vunpack.c.l.b16 %v60
    %v282 = vunpack.c.h.b16 %v60
    %v283 = vunpack.c.l.b16 %v61
    %v284 = vunpack.c.h.b16 %v61
    %v285 = vunpack.c.l.b16 %v62
    %v286 = vunpack.c.h.b16 %v62
    %v287 = vunpack.c.l.b16 %v63
    %v288 = vunpack.c.h.b16 %v63
    %v289 = vunpack.c.l.b16 %v64
    %v290 = vunpack.c.h.b16 %v64
    %v291 = vunpack.c.l.b16 %v65
    %v292 = vunpack.c.h.b16 %v65
    %v293 = vunpack.c.l.b16 %v66
    %v294 = vunpack.c.h.b16 %v66
    %v295 = vunpack.c.l.b16 %v67
    %v296 = vunpack.c.h.b16 %v67
    %v297 = vunpack.c.l.b16 %v68
    %v298 = vunpack.c.h.b16 %v68
    %v299 = vunpack.c.l.b16 %v69
    %v300 = vunpack.c.h.b16 %v69
    %v301 = vunpack.c.l.b16 %v70
    %v302 = vunpack.c.h.b16 %v70
    %v303 = vunpack.c.l.b16 %v71
    %v304 = vunpack.c.h.b16 %v71
    %v305 = vunpack.c.l.b16 %v72
    %v306 = vunpack.c.h.b16 %v72
    %v307 = vunpack.c.l.b16 %v73
    %v308 = vunpack.c.h.b16 %v73
    %v309 = vunpack.c.l.b16 %v74
    %v310 = vunpack.c.h.b16 %v74
    %v311 = vunpack.c.l.b16 %v75
    %v312 = vunpack.c.h.b16 %v75
    %v313 = vunpack.c.l.b16 %v76
    %v314 = vunpack.c.h.b16 %v76
    %v315 = vunpack.c.l.b16 %v77
    %v316 = vunpack.c.h.b16 %v77
    %v317 = vunpack.c.l.b16 %v78
    %v318 = vunpack.c.h.b16 %v78
    %v319 = vunpack.c.l.b16 %v79
    %v320 = vunpack.c.h.b16 %v79
    %v321 = vunpack.c.l.b16 %v80
    %v322 = vunpack.c.h.b16 %v80
    %v323 = vunpack.c.l.b16 %v81
    %v324 = vunpack.c.h.b16 %v81
    %v325 = vunpack.c.l.b16 %v82
    %v326 = vunpack.c.h.b16 %v82
    %v327 = vunpack.c.l.b16 %v83
    %v328 = vunpack.c.h.b16 %v83
    %v329 = vunpack.c.l.b16 %v84
    %v330 = vunpack.c.h.b16 %v84
    %v331 = vunpack.c.l.b16 %v85
    %v332 = vunpack.c.h.b16 %v85
    %v333 = vunpack.c.l.b16 %v86
    %v334 = vunpack.c.h.b16 %v86
    %v335 = vunpack.c.l.b16 %v87
    %v336 = vunpack.c.h.b16 %v87
    %v337 = vunpack.c.l.b16 %v88
    %v338 = vunpack.c.h.b16 %v88
    %v339 = vunpack.c.l.b16 %v89
    %v340 = vunpack.c.h.b16 %v89
    %v341 = vunpack.c.l.b16 %v90
    %v342 = vunpack.c.h.b16 %v90
    %v343 = vunpack.c.l.b16 %v91
    %v344 = vunpack.c.h.b16 %v91
    %v345 = vunpack.c.l.b16 %v92
    %v346 = vunpack.c.h.b16 %v92
    %v347 = vunpack.c.l.b16 %v93
    %v348 = vunpack.c.h.b16 %v93
    %v349 = vunpack.c.l.b16 %v94
    %v350 = vunpack.c.h.b16 %v94
    %v351 = vunpack.c.l.b16 %v95
    %v352 = vunpack.c.h.b16 %v95
    %v353 = vpack.c.b16 %v215, %v209
    %v354 = vpack.c.b16 %v216, %v210
    %v355 = vpack.c.b16 %v217, %v211
    %v356 = vpack.c.b16 %v218, %v212
    %v357 = vpack.c.b16 %v219, %v213
    %v358 = vpack.c.b16 %v220, %v214
    %v359 = vpack.c.b16 %v227, %v221
    %v360 = vpack.c.b16 %v228, %v222
    %v361 = vpack.c.b16 %v229, %v223
    %v362 = vpack.c.b16 %v230, %v224
    %v363 = vpack.c.b16 %v231, %v225
    %v364 = vpack.c.b16 %v232, %v226
    %v365 = vpack.c.b16 %v239, %v233
    %v366 = vpack.c.b16 %v240, %v234
    %v367 = vpack.c.b16 %v241, %v235
    %v368 = vpack.c.b16 %v242, %v236
    %v369 = vpack.c.b16 %v243, %v237
    %v370 = vpack.c.b16 %v244, %v238
    %v371 = vpack.c.b16 %v251, %v245
    %v372 = vpack.c.b16 %v252, %v246
    %v373 = vpack.c.b16 %v253, %v247
    %v374 = vpack.c.b16 %v254, %v248
    %v375 = vpack.c.b16 %v255, %v249
    %v376 = vpack.c.b16 %v256, %v250
    %v377 = vpack.c.b16 %v263, %v257
    %v378 = vpack.c.b16 %v264, %v258
    %v379 = vpack.c.b16 %v265, %v259
    %v380 = vpack.c.b16 %v266, %v260
    %v381 = vpack.c.b16 %v267, %v261
    %v382 = vpack.c.b16 %v268, %v262
    %v383 = vpack.c.b16 %v275, %v269
    %v384 = vpack.c.b16 %v276, %v270
    %v385 = vpack.c.b16 %v277, %v271
    %v386 = vpack.c.b16 %v278, %v272
    %v387 = vpack.c.b16 %v279, %v273
    %v388 = vpack.c.b16 %v280, %v274
    %v389 = vpack.c.b16 %v287, %v281
    %v390 = vpack.c.b16 %v288, %v282
    %v391 = vpack.c.b16 %v289, %v283
    %v392 = vpack.c.b16 %v290, %v284
    %v393 = vpack.c.b16 %v291, %v285
    %v394 = vpack.c.b16 %v292, %v286
    %v395 = vpack.c.b16 %v299, %v293
    %v396 = vpack.c.b16 %v300, %v294
    %v397 = vpack.c.b16 %v301, %v295
    %v398 = vpack.c.b16 %v302, %v296
    %v399 = vpack.c.b16 %v303, %v297
    %v400 = vpack.c.b16 %v304, %v298
    %v401 = vpack.c.b16 %v311, %v305
    %v402 = vpack.c.b16 %v312, %v306
    %v403 = vpack.c.b16 %v313, %v307
    %v404 = vpack.c.b16 %v314, %v308
    %v405 = vpack.c.b16 %v315, %v309
    %v406 = vpack.c.b16 %v316, %v310
    %v407 = vpack.c.b16 %v323, %v317
    %v408 = vpack.c.b16 %v324, %v318
    %v409 = vpack.c.b16 %v325, %v319
    %v410 = vpack.c.b16 %v326, %v320
    %v411 = vpack.c.b16 %v327, %v321
    %v412 = vpack.c.b16 %v328, %v322
    %v413 = vpack.c.b16 %v335, %v329
    %v414 = vpack.c.b16 %v336, %v330
    %v415 = vpack.c.b16 %v337, %v331
    %v416 = vpack.c.b16 %v338, %v332
    %v417 = vpack.c.b16 %v339, %v333
    %v418 = vpack.c.b16 %v340, %v334
    %v419 = vpack.c.b16 %v347, %v341
    %v420 = vpack.c.b16 %v348, %v342
    %v421 = vpack.c.b16 %v349, %v343
    %v422 = vpack.c.b16 %v350, %v344
    %v423 = vpack.c.b16 %v351, %v345
    %v424 = vpack.c.b16 %v352, %v346
    %vm497 = vcmask 523264
    %v499 = vsel %vm497, %v135, 0
    %501 = vmatprep.subr.bf16.mxu0 %v396
    %502 = vmatpush1.bf16.msra.mxu0 %v395
    %503 = vmatprep.subr.bf16.mxu0 %v390
    %504 = vmatpush1.bf16.msra.mxu0 %v389
    %505 = vmatprep.subr.bf16.mxu0 %v384
    %506 = vmatpush1.bf16.msra.mxu0 %v383
    %507 = vmatprep.subr.bf16.mxu0 %v378
    %508 = vmatpush1.bf16.msra.mxu0 %v377
    %509 = vmatprep.subr.bf16.mxu0 %v372
    %510 = vmatpush1.bf16.msra.mxu0 %v371
    %511 = vmatprep.subr.bf16.mxu0 %v366
    %512 = vmatpush1.bf16.msra.mxu0 %v365
    %513 = vmatprep.subr.bf16.mxu0 %v360
    %514 = vmatpush1.bf16.msra.mxu0 %v359
    %515 = vmatprep.subr.bf16.mxu0 %v354
    %516 = vmatpush1.bf16.msra.mxu0 %v353
    %517 = vmatprep.subr.bf16.mxu0 0
    %518 = vmatpush2.bf16.msra.mxu0 0
    %519 = vmatprep.subr.bf16.mxu0 0
    %520 = vmatpush2.bf16.msra.mxu0 0
    %521 = vmatprep.subr.bf16.mxu0 0
    %522 = vmatpush2.bf16.msra.mxu0 0
    %523 = vmatprep.subr.bf16.mxu0 0
    %524 = vmatpush2.bf16.msra.mxu0 0
    %525 = vmatprep.subr.bf16.mxu0 %v420
    %526 = vmatpush2.bf16.msra.mxu0 %v419
    %527 = vmatprep.subr.bf16.mxu0 %v414
    %528 = vmatpush2.bf16.msra.mxu0 %v413
    %529 = vmatprep.subr.bf16.mxu0 %v408
    %530 = vmatpush2.bf16.msra.mxu0 %v407
    %531 = vmatprep.subr.bf16.mxu0 %v402
    %532 = vmatpush2.bf16.msra.mxu0 %v401
    %533 = vmatprep.mubr.bf16.mxu0 %v499
    %534 = vmatmul.mubr.bf16.gmra.mxu0 %v134
    %v535 = vpop.f32.mrf.mxu0
    %v536 = vadd.f32 %v101, %v535
    %v537 = vpop.f32.mrf.mxu0
    %v538 = vadd.f32 %v105, %v537
    %v539 = vpop.f32.mrf.mxu0
    %v540 = vadd.f32 %v101, %v539
    %v541 = vpop.f32.mrf.mxu0
    %v542 = vadd.f32 %v105, %v541
    %543 = vdwg.mxu0
    %544 = vmatprep.subr.bf16.mxu0 %v398
    %545 = vmatpush1.bf16.msra.mxu0 %v397
    %546 = vmatprep.subr.bf16.mxu0 %v392
    %547 = vmatpush1.bf16.msra.mxu0 %v391
    %548 = vmatprep.subr.bf16.mxu0 %v386
    %549 = vmatpush1.bf16.msra.mxu0 %v385
    %550 = vmatprep.subr.bf16.mxu0 %v380
    %551 = vmatpush1.bf16.msra.mxu0 %v379
    %552 = vmatprep.subr.bf16.mxu0 %v374
    %553 = vmatpush1.bf16.msra.mxu0 %v373
    %554 = vmatprep.subr.bf16.mxu0 %v368
    %555 = vmatpush1.bf16.msra.mxu0 %v367
    %556 = vmatprep.subr.bf16.mxu0 %v362
    %557 = vmatpush1.bf16.msra.mxu0 %v361
    %558 = vmatprep.subr.bf16.mxu0 %v356
    %559 = vmatpush1.bf16.msra.mxu0 %v355
    %560 = vmatprep.subr.bf16.mxu0 0
    %561 = vmatpush2.bf16.msra.mxu0 0
    %562 = vmatprep.subr.bf16.mxu0 0
    %563 = vmatpush2.bf16.msra.mxu0 0
    %564 = vmatprep.subr.bf16.mxu0 0
    %565 = vmatpush2.bf16.msra.mxu0 0
    %566 = vmatprep.subr.bf16.mxu0 0
    %567 = vmatpush2.bf16.msra.mxu0 0
    %568 = vmatprep.subr.bf16.mxu0 %v422
    %569 = vmatpush2.bf16.msra.mxu0 %v421
    %570 = vmatprep.subr.bf16.mxu0 %v416
    %571 = vmatpush2.bf16.msra.mxu0 %v415
    %572 = vmatprep.subr.bf16.mxu0 %v410
    %573 = vmatpush2.bf16.msra.mxu0 %v409
    %574 = vmatprep.subr.bf16.mxu0 %v404
    %575 = vmatpush2.bf16.msra.mxu0 %v403
    %576 = vmatprep.mubr.bf16.mxu0 %v499
    %577 = vmatmul.mubr.bf16.gmra.mxu0 %v134
    %v578 = vpop.f32.mrf.mxu0
    %v579 = vadd.f32 %v109, %v578
    %v580 = vpop.f32.mrf.mxu0
    %v581 = vadd.f32 %v113, %v580
    %v582 = vpop.f32.mrf.mxu0
    %v583 = vadd.f32 %v109, %v582
    %v584 = vpop.f32.mrf.mxu0
    %v585 = vadd.f32 %v113, %v584
    %586 = vdwg.mxu0
    %587 = vmatprep.subr.bf16.mxu0 %v400
    %588 = vmatpush1.bf16.msra.mxu0 %v399
    %589 = vmatprep.subr.bf16.mxu0 %v394
    %590 = vmatpush1.bf16.msra.mxu0 %v393
    %591 = vmatprep.subr.bf16.mxu0 %v388
    %592 = vmatpush1.bf16.msra.mxu0 %v387
    %593 = vmatprep.subr.bf16.mxu0 %v382
    %594 = vmatpush1.bf16.msra.mxu0 %v381
    %595 = vmatprep.subr.bf16.mxu0 %v376
    %596 = vmatpush1.bf16.msra.mxu0 %v375
    %597 = vmatprep.subr.bf16.mxu0 %v370
    %598 = vmatpush1.bf16.msra.mxu0 %v369
    %599 = vmatprep.subr.bf16.mxu0 %v364
    %600 = vmatpush1.bf16.msra.mxu0 %v363
    %601 = vmatprep.subr.bf16.mxu0 %v358
    %602 = vmatpush1.bf16.msra.mxu0 %v357
    %603 = vmatprep.subr.bf16.mxu0 0
    %604 = vmatpush2.bf16.msra.mxu0 0
    %605 = vmatprep.subr.bf16.mxu0 0
    %606 = vmatpush2.bf16.msra.mxu0 0
    %607 = vmatprep.subr.bf16.mxu0 0
    %608 = vmatpush2.bf16.msra.mxu0 0
    %609 = vmatprep.subr.bf16.mxu0 0
    %610 = vmatpush2.bf16.msra.mxu0 0
    %611 = vmatprep.subr.bf16.mxu0 %v424
    %612 = vmatpush2.bf16.msra.mxu0 %v423
    %613 = vmatprep.subr.bf16.mxu0 %v418
    %614 = vmatpush2.bf16.msra.mxu0 %v417
    %615 = vmatprep.subr.bf16.mxu0 %v412
    %616 = vmatpush2.bf16.msra.mxu0 %v411
    %617 = vmatprep.subr.bf16.mxu0 %v406
    %618 = vmatpush2.bf16.msra.mxu0 %v405
    %619 = vmatprep.mubr.bf16.mxu0 %v499
    %620 = vmatmul.mubr.bf16.gmra.mxu0 %v134
    %v621 = vpop.f32.mrf.mxu0
    %v622 = vadd.f32 %v117, %v621
    %v623 = vpop.f32.mrf.mxu0
    %v624 = vadd.f32 %v121, %v623
    %v625 = vpop.f32.mrf.mxu0
    %v626 = vadd.f32 %v117, %v625
    %v627 = vpop.f32.mrf.mxu0
    %v628 = vadd.f32 %v121, %v627
    %629 = vdwg.mxu0
    %v630 = vmax.f32 %v536, 0.0
    %v631 = vmax.f32 %v538, 0.0
    %v632 = vmax.f32 %v579, 0.0
    %v633 = vmax.f32 %v581, 0.0
    %v634 = vmax.f32 %v622, 0.0
    %v635 = vmax.f32 %v624, 0.0
    %v636 = vmax.f32 %v540, 0.0
    %v637 = vmax.f32 %v542, 0.0
    %v638 = vmax.f32 %v583, 0.0
    %v639 = vmax.f32 %v585, 0.0
    %v640 = vmax.f32 %v626, 0.0
    %v641 = vmax.f32 %v628, 0.0
    %v642 = vpack.c.bf16 %v636, %v630
    %v643 = vpack.c.bf16 %v637, %v631
    %v644 = vpack.c.bf16 %v638, %v632
    %v645 = vpack.c.bf16 %v639, %v633
    %v646 = vpack.c.bf16 %v640, %v634
    %v647 = vpack.c.bf16 %v641, %v635
    %v648 = vld [vmem:[%s3] sm:$0xff]
    %v649 = vld [vmem:[%s3 + $0x8] sm:$0xff]
    %v650 = vld [vmem:[%s3 + $0x10] sm:$0xff]
    %v651 = vld [vmem:[%s3 + $0x18] sm:$0xff]
    %v652 = vld [vmem:[%s3 + $0x20] sm:$0xff]
    %v653 = vld [vmem:[%s3 + $0x28] sm:$0xff]
    %v654 = vld [vmem:[%s3 + $0x30] sm:$0xff]
    %v655 = vld [vmem:[%s3 + $0x38] sm:$0xff]
    %v656 = vld [vmem:[%s3 + $0x40] sm:$0xff]
    %v657 = vld [vmem:[%s3 + $0x48] sm:$0xff]
    %v658 = vld [vmem:[%s3 + $0x50] sm:$0xff]
    %v659 = vld [vmem:[%s3 + $0x58] sm:$0xff]
    %v660 = vld [vmem:[%s3 + $0x60] sm:$0xff]
    %v661 = vld [vmem:[%s3 + $0x68] sm:$0xff]
    %v662 = vld [vmem:[%s3 + $0x70] sm:$0xff]
    %v663 = vld [vmem:[%s3 + $0x78] sm:$0xff]
    %v664 = vld [vmem:[%s3 + $0x80] sm:$0xff]
    %v665 = vld [vmem:[%s3 + $0x88] sm:$0xff]
    %v666 = vld [vmem:[%s3 + $0x90] sm:$0xff]
    %v667 = vld [vmem:[%s3 + $0x98] sm:$0xff]
    %v668 = vld [vmem:[%s3 + $0xa0] sm:$0xff]
    %v669 = vld [vmem:[%s3 + $0xa8] sm:$0xff]
    %v670 = vld [vmem:[%s3 + $0xb0] sm:$0xff]
    %v671 = vld [vmem:[%s3 + $0xb8] sm:$0xff]
    %v672 = vld [vmem:[%s3 + $0xc0] sm:$0xff]
    %v673 = vld [vmem:[%s3 + $0xc8] sm:$0xff]
    %v674 = vld [vmem:[%s3 + $0xd0] sm:$0xff]
    %v675 = vld [vmem:[%s3 + $0xd8] sm:$0xff]
    %v676 = vld [vmem:[%s3 + $0xe0] sm:$0xff]
    %v677 = vld [vmem:[%s3 + $0xe8] sm:$0xff]
    %v678 = vld [vmem:[%s3 + $0xf0] sm:$0xff]
    %v679 = vld [vmem:[%s3 + $0xf8] sm:$0xff]
    %v680 = vld [vmem:[%s3 + $0x100] sm:$0xff]
    %v681 = vld [vmem:[%s3 + $0x108] sm:$0xff]
    %v682 = vld [vmem:[%s3 + $0x110] sm:$0xff]
    %v683 = vld [vmem:[%s3 + $0x118] sm:$0xff]
    %v684 = vld [vmem:[%s3 + $0x120] sm:$0xff]
    %v685 = vld [vmem:[%s3 + $0x128] sm:$0xff]
    %v686 = vld [vmem:[%s3 + $0x130] sm:$0xff]
    %v687 = vld [vmem:[%s3 + $0x138] sm:$0xff]
    %v688 = vld [vmem:[%s3 + $0x140] sm:$0xff]
    %v689 = vld [vmem:[%s3 + $0x148] sm:$0xff]
    %v690 = vld [vmem:[%s3 + $0x150] sm:$0xff]
    %v691 = vld [vmem:[%s3 + $0x158] sm:$0xff]
    %v692 = vld [vmem:[%s3 + $0x160] sm:$0xff]
    %v693 = vld [vmem:[%s3 + $0x168] sm:$0xff]
    %v694 = vld [vmem:[%s3 + $0x170] sm:$0xff]
    %v695 = vld [vmem:[%s3 + $0x178] sm:$0xff]
    %v696 = vld [vmem:[%s3 + $0x180] sm:$0xff]
    %v697 = vld [vmem:[%s3 + $0x188] sm:$0xff]
    %v698 = vld [vmem:[%s3 + $0x190] sm:$0xff]
    %v699 = vld [vmem:[%s3 + $0x198] sm:$0xff]
    %v700 = vld [vmem:[%s3 + $0x1a0] sm:$0xff]
    %v701 = vld [vmem:[%s3 + $0x1a8] sm:$0xff]
    %v702 = vld [vmem:[%s3 + $0x1b0] sm:$0xff]
    %v703 = vld [vmem:[%s3 + $0x1b8] sm:$0xff]
    %v704 = vld [vmem:[%s3 + $0x1c0] sm:$0xff]
    %v705 = vld [vmem:[%s3 + $0x1c8] sm:$0xff]
    %v706 = vld [vmem:[%s3 + $0x1d0] sm:$0xff]
    %v707 = vld [vmem:[%s3 + $0x1d8] sm:$0xff]
    %v708 = vld [vmem:[%s3 + $0x1e0] sm:$0xff]
    %v709 = vld [vmem:[%s3 + $0x1e8] sm:$0xff]
    %v710 = vld [vmem:[%s3 + $0x1f0] sm:$0xff]
    %v711 = vld [vmem:[%s3 + $0x1f8] sm:$0xff]
    %v712 = vld [vmem:[%s3 + $0x200] sm:$0xff]
    %v713 = vld [vmem:[%s3 + $0x208] sm:$0xff]
    %v714 = vld [vmem:[%s3 + $0x210] sm:$0xff]
    %v715 = vld [vmem:[%s3 + $0x218] sm:$0xff]
    %v716 = vld [vmem:[%s3 + $0x220] sm:$0xff]
    %v717 = vld [vmem:[%s3 + $0x228] sm:$0xff]
    %v718 = vld [vmem:[%s3 + $0x230] sm:$0xff]
    %v719 = vld [vmem:[%s3 + $0x238] sm:$0xff]
    %v720 = vld [vmem:[%s3 + $0x240] sm:$0xff]
    %v721 = vld [vmem:[%s3 + $0x248] sm:$0xff]
    %v722 = vld [vmem:[%s3 + $0x250] sm:$0xff]
    %v723 = vld [vmem:[%s3 + $0x258] sm:$0xff]
    %v724 = vld [vmem:[%s3 + $0x260] sm:$0xff]
    %v725 = vld [vmem:[%s3 + $0x268] sm:$0xff]
    %v726 = vld [vmem:[%s3 + $0x270] sm:$0xff]
    %v727 = vld [vmem:[%s3 + $0x278] sm:$0xff]
    %v728 = vld [vmem:[%s3 + $0x280] sm:$0xff]
    %v729 = vld [vmem:[%s3 + $0x288] sm:$0xff]
    %v730 = vld [vmem:[%s3 + $0x290] sm:$0xff]
    %v731 = vld [vmem:[%s3 + $0x298] sm:$0xff]
    %v732 = vld [vmem:[%s3 + $0x2a0] sm:$0xff]
    %v733 = vld [vmem:[%s3 + $0x2a8] sm:$0xff]
    %v734 = vld [vmem:[%s3 + $0x2b0] sm:$0xff]
    %v735 = vld [vmem:[%s3 + $0x2b8] sm:$0xff]
    %v736 = vld [vmem:[%s3 + $0x2c0] sm:$0xff]
    %v737 = vld [vmem:[%s3 + $0x2c8] sm:$0xff]
    %v738 = vld [vmem:[%s3 + $0x2d0] sm:$0xff]
    %v739 = vld [vmem:[%s3 + $0x2d8] sm:$0xff]
    %v740 = vld [vmem:[%s3 + $0x2e0] sm:$0xff]
    %v741 = vld [vmem:[%s3 + $0x2e8] sm:$0xff]
    %v742 = vld [vmem:[%s3 + $0x2f0] sm:$0xff]
    %v743 = vld [vmem:[%s3 + $0x2f8] sm:$0xff]
    %v744 = vld [vmem:[%s4] sm:$0x3]
    %v746 = vlaneseq
    %v747 = vshrl.u32 %v746, 7
    %v748 = vsub.s32 0, %v747
    %v749 = vrot.slane %v744, %v748
    %v750 = vlaneseq
    %v751 = vshrl.u32 %v750, 7
    %v752 = vsub.s32 1, %v751
    %v753 = vrot.slane %v744, %v752
    %v852 = vunpack.c.l.b16 %v648
    %v853 = vunpack.c.h.b16 %v648
    %v854 = vunpack.c.l.b16 %v649
    %v855 = vunpack.c.h.b16 %v649
    %v856 = vunpack.c.l.b16 %v650
    %v857 = vunpack.c.h.b16 %v650
    %v858 = vunpack.c.l.b16 %v651
    %v859 = vunpack.c.h.b16 %v651
    %v860 = vunpack.c.l.b16 %v652
    %v861 = vunpack.c.h.b16 %v652
    %v862 = vunpack.c.l.b16 %v653
    %v863 = vunpack.c.h.b16 %v653
    %v864 = vunpack.c.l.b16 %v654
    %v865 = vunpack.c.h.b16 %v654
    %v866 = vunpack.c.l.b16 %v655
    %v867 = vunpack.c.h.b16 %v655
    %v868 = vunpack.c.l.b16 %v656
    %v869 = vunpack.c.h.b16 %v656
    %v870 = vunpack.c.l.b16 %v657
    %v871 = vunpack.c.h.b16 %v657
    %v872 = vunpack.c.l.b16 %v658
    %v873 = vunpack.c.h.b16 %v658
    %v874 = vunpack.c.l.b16 %v659
    %v875 = vunpack.c.h.b16 %v659
    %v876 = vunpack.c.l.b16 %v660
    %v877 = vunpack.c.h.b16 %v660
    %v878 = vunpack.c.l.b16 %v661
    %v879 = vunpack.c.h.b16 %v661
    %v880 = vunpack.c.l.b16 %v662
    %v881 = vunpack.c.h.b16 %v662
    %v882 = vunpack.c.l.b16 %v663
    %v883 = vunpack.c.h.b16 %v663
    %v884 = vunpack.c.l.b16 %v664
    %v885 = vunpack.c.h.b16 %v664
    %v886 = vunpack.c.l.b16 %v665
    %v887 = vunpack.c.h.b16 %v665
    %v888 = vunpack.c.l.b16 %v666
    %v889 = vunpack.c.h.b16 %v666
    %v890 = vunpack.c.l.b16 %v667
    %v891 = vunpack.c.h.b16 %v667
    %v892 = vunpack.c.l.b16 %v668
    %v893 = vunpack.c.h.b16 %v668
    %v894 = vunpack.c.l.b16 %v669
    %v895 = vunpack.c.h.b16 %v669
    %v896 = vunpack.c.l.b16 %v670
    %v897 = vunpack.c.h.b16 %v670
    %v898 = vunpack.c.l.b16 %v671
    %v899 = vunpack.c.h.b16 %v671
    %v900 = vunpack.c.l.b16 %v672
    %v901 = vunpack.c.h.b16 %v672
    %v902 = vunpack.c.l.b16 %v673
    %v903 = vunpack.c.h.b16 %v673
    %v904 = vunpack.c.l.b16 %v674
    %v905 = vunpack.c.h.b16 %v674
    %v906 = vunpack.c.l.b16 %v675
    %v907 = vunpack.c.h.b16 %v675
    %v908 = vunpack.c.l.b16 %v676
    %v909 = vunpack.c.h.b16 %v676
    %v910 = vunpack.c.l.b16 %v677
    %v911 = vunpack.c.h.b16 %v677
    %v912 = vunpack.c.l.b16 %v678
    %v913 = vunpack.c.h.b16 %v678
    %v914 = vunpack.c.l.b16 %v679
    %v915 = vunpack.c.h.b16 %v679
    %v916 = vunpack.c.l.b16 %v680
    %v917 = vunpack.c.h.b16 %v680
    %v918 = vunpack.c.l.b16 %v681
    %v919 = vunpack.c.h.b16 %v681
    %v920 = vunpack.c.l.b16 %v682
    %v921 = vunpack.c.h.b16 %v682
    %v922 = vunpack.c.l.b16 %v683
    %v923 = vunpack.c.h.b16 %v683
    %v924 = vunpack.c.l.b16 %v684
    %v925 = vunpack.c.h.b16 %v684
    %v926 = vunpack.c.l.b16 %v685
    %v927 = vunpack.c.h.b16 %v685
    %v928 = vunpack.c.l.b16 %v686
    %v929 = vunpack.c.h.b16 %v686
    %v930 = vunpack.c.l.b16 %v687
    %v931 = vunpack.c.h.b16 %v687
    %v932 = vunpack.c.l.b16 %v688
    %v933 = vunpack.c.h.b16 %v688
    %v934 = vunpack.c.l.b16 %v689
    %v935 = vunpack.c.h.b16 %v689
    %v936 = vunpack.c.l.b16 %v690
    %v937 = vunpack.c.h.b16 %v690
    %v938 = vunpack.c.l.b16 %v691
    %v939 = vunpack.c.h.b16 %v691
    %v940 = vunpack.c.l.b16 %v692
    %v941 = vunpack.c.h.b16 %v692
    %v942 = vunpack.c.l.b16 %v693
    %v943 = vunpack.c.h.b16 %v693
    %v944 = vunpack.c.l.b16 %v694
    %v945 = vunpack.c.h.b16 %v694
    %v946 = vunpack.c.l.b16 %v695
    %v947 = vunpack.c.h.b16 %v695
    %v948 = vunpack.c.l.b16 %v696
    %v949 = vunpack.c.h.b16 %v696
    %v950 = vunpack.c.l.b16 %v697
    %v951 = vunpack.c.h.b16 %v697
    %v952 = vunpack.c.l.b16 %v698
    %v953 = vunpack.c.h.b16 %v698
    %v954 = vunpack.c.l.b16 %v699
    %v955 = vunpack.c.h.b16 %v699
    %v956 = vunpack.c.l.b16 %v700
    %v957 = vunpack.c.h.b16 %v700
    %v958 = vunpack.c.l.b16 %v701
    %v959 = vunpack.c.h.b16 %v701
    %v960 = vunpack.c.l.b16 %v702
    %v961 = vunpack.c.h.b16 %v702
    %v962 = vunpack.c.l.b16 %v703
    %v963 = vunpack.c.h.b16 %v703
    %v964 = vunpack.c.l.b16 %v704
    %v965 = vunpack.c.h.b16 %v704
    %v966 = vunpack.c.l.b16 %v705
    %v967 = vunpack.c.h.b16 %v705
    %v968 = vunpack.c.l.b16 %v706
    %v969 = vunpack.c.h.b16 %v706
    %v970 = vunpack.c.l.b16 %v707
    %v971 = vunpack.c.h.b16 %v707
    %v972 = vunpack.c.l.b16 %v708
    %v973 = vunpack.c.h.b16 %v708
    %v974 = vunpack.c.l.b16 %v709
    %v975 = vunpack.c.h.b16 %v709
    %v976 = vunpack.c.l.b16 %v710
    %v977 = vunpack.c.h.b16 %v710
    %v978 = vunpack.c.l.b16 %v711
    %v979 = vunpack.c.h.b16 %v711
    %v980 = vunpack.c.l.b16 %v712
    %v981 = vunpack.c.h.b16 %v712
    %v982 = vunpack.c.l.b16 %v713
    %v983 = vunpack.c.h.b16 %v713
    %v984 = vunpack.c.l.b16 %v714
    %v985 = vunpack.c.h.b16 %v714
    %v986 = vunpack.c.l.b16 %v715
    %v987 = vunpack.c.h.b16 %v715
    %v988 = vunpack.c.l.b16 %v716
    %v989 = vunpack.c.h.b16 %v716
    %v990 = vunpack.c.l.b16 %v717
    %v991 = vunpack.c.h.b16 %v717
    %v992 = vunpack.c.l.b16 %v718
    %v993 = vunpack.c.h.b16 %v718
    %v994 = vunpack.c.l.b16 %v719
    %v995 = vunpack.c.h.b16 %v719
    %v996 = vunpack.c.l.b16 %v720
    %v997 = vunpack.c.h.b16 %v720
    %v998 = vunpack.c.l.b16 %v721
    %v999 = vunpack.c.h.b16 %v721
    %v1000 = vunpack.c.l.b16 %v722
    %v1001 = vunpack.c.h.b16 %v722
    %v1002 = vunpack.c.l.b16 %v723
    %v1003 = vunpack.c.h.b16 %v723
    %v1004 = vunpack.c.l.b16 %v724
    %v1005 = vunpack.c.h.b16 %v724
    %v1006 = vunpack.c.l.b16 %v725
    %v1007 = vunpack.c.h.b16 %v725
    %v1008 = vunpack.c.l.b16 %v726
    %v1009 = vunpack.c.h.b16 %v726
    %v1010 = vunpack.c.l.b16 %v727
    %v1011 = vunpack.c.h.b16 %v727
    %v1012 = vunpack.c.l.b16 %v728
    %v1013 = vunpack.c.h.b16 %v728
    %v1014 = vunpack.c.l.b16 %v729
    %v1015 = vunpack.c.h.b16 %v729
    %v1016 = vunpack.c.l.b16 %v730
    %v1017 = vunpack.c.h.b16 %v730
    %v1018 = vunpack.c.l.b16 %v731
    %v1019 = vunpack.c.h.b16 %v731
    %v1020 = vunpack.c.l.b16 %v732
    %v1021 = vunpack.c.h.b16 %v732
    %v1022 = vunpack.c.l.b16 %v733
    %v1023 = vunpack.c.h.b16 %v733
    %v1024 = vunpack.c.l.b16 %v734
    %v1025 = vunpack.c.h.b16 %v734
    %v1026 = vunpack.c.l.b16 %v735
    %v1027 = vunpack.c.h.b16 %v735
    %v1028 = vunpack.c.l.b16 %v736
    %v1029 = vunpack.c.h.b16 %v736
    %v1030 = vunpack.c.l.b16 %v737
    %v1031 = vunpack.c.h.b16 %v737
    %v1032 = vunpack.c.l.b16 %v738
    %v1033 = vunpack.c.h.b16 %v738
    %v1034 = vunpack.c.l.b16 %v739
    %v1035 = vunpack.c.h.b16 %v739
    %v1036 = vunpack.c.l.b16 %v740
    %v1037 = vunpack.c.h.b16 %v740
    %v1038 = vunpack.c.l.b16 %v741
    %v1039 = vunpack.c.h.b16 %v741
    %v1040 = vunpack.c.l.b16 %v742
    %v1041 = vunpack.c.h.b16 %v742
    %v1042 = vunpack.c.l.b16 %v743
    %v1043 = vunpack.c.h.b16 %v743
    %v1044 = vpack.c.b16 %v854, %v852
    %v1045 = vpack.c.b16 %v855, %v853
    %v1046 = vpack.c.b16 %v858, %v856
    %v1047 = vpack.c.b16 %v859, %v857
    %v1048 = vpack.c.b16 %v862, %v860
    %v1049 = vpack.c.b16 %v863, %v861
    %v1050 = vpack.c.b16 %v866, %v864
    %v1051 = vpack.c.b16 %v867, %v865
    %v1052 = vpack.c.b16 %v870, %v868
    %v1053 = vpack.c.b16 %v871, %v869
    %v1054 = vpack.c.b16 %v874, %v872
    %v1055 = vpack.c.b16 %v875, %v873
    %v1056 = vpack.c.b16 %v878, %v876
    %v1057 = vpack.c.b16 %v879, %v877
    %v1058 = vpack.c.b16 %v882, %v880
    %v1059 = vpack.c.b16 %v883, %v881
    %v1060 = vpack.c.b16 %v886, %v884
    %v1061 = vpack.c.b16 %v887, %v885
    %v1062 = vpack.c.b16 %v890, %v888
    %v1063 = vpack.c.b16 %v891, %v889
    %v1064 = vpack.c.b16 %v894, %v892
    %v1065 = vpack.c.b16 %v895, %v893
    %v1066 = vpack.c.b16 %v898, %v896
    %v1067 = vpack.c.b16 %v899, %v897
    %v1068 = vpack.c.b16 %v902, %v900
    %v1069 = vpack.c.b16 %v903, %v901
    %v1070 = vpack.c.b16 %v906, %v904
    %v1071 = vpack.c.b16 %v907, %v905
    %v1072 = vpack.c.b16 %v910, %v908
    %v1073 = vpack.c.b16 %v911, %v909
    %v1074 = vpack.c.b16 %v914, %v912
    %v1075 = vpack.c.b16 %v915, %v913
    %v1076 = vpack.c.b16 %v918, %v916
    %v1077 = vpack.c.b16 %v919, %v917
    %v1078 = vpack.c.b16 %v922, %v920
    %v1079 = vpack.c.b16 %v923, %v921
    %v1080 = vpack.c.b16 %v926, %v924
    %v1081 = vpack.c.b16 %v927, %v925
    %v1082 = vpack.c.b16 %v930, %v928
    %v1083 = vpack.c.b16 %v931, %v929
    %v1084 = vpack.c.b16 %v934, %v932
    %v1085 = vpack.c.b16 %v935, %v933
    %v1086 = vpack.c.b16 %v938, %v936
    %v1087 = vpack.c.b16 %v939, %v937
    %v1088 = vpack.c.b16 %v942, %v940
    %v1089 = vpack.c.b16 %v943, %v941
    %v1090 = vpack.c.b16 %v946, %v944
    %v1091 = vpack.c.b16 %v947, %v945
    %v1092 = vpack.c.b16 %v950, %v948
    %v1093 = vpack.c.b16 %v951, %v949
    %v1094 = vpack.c.b16 %v954, %v952
    %v1095 = vpack.c.b16 %v955, %v953
    %v1096 = vpack.c.b16 %v958, %v956
    %v1097 = vpack.c.b16 %v959, %v957
    %v1098 = vpack.c.b16 %v962, %v960
    %v1099 = vpack.c.b16 %v963, %v961
    %v1100 = vpack.c.b16 %v966, %v964
    %v1101 = vpack.c.b16 %v967, %v965
    %v1102 = vpack.c.b16 %v970, %v968
    %v1103 = vpack.c.b16 %v971, %v969
    %v1104 = vpack.c.b16 %v974, %v972
    %v1105 = vpack.c.b16 %v975, %v973
    %v1106 = vpack.c.b16 %v978, %v976
    %v1107 = vpack.c.b16 %v979, %v977
    %v1108 = vpack.c.b16 %v982, %v980
    %v1109 = vpack.c.b16 %v983, %v981
    %v1110 = vpack.c.b16 %v986, %v984
    %v1111 = vpack.c.b16 %v987, %v985
    %v1112 = vpack.c.b16 %v990, %v988
    %v1113 = vpack.c.b16 %v991, %v989
    %v1114 = vpack.c.b16 %v994, %v992
    %v1115 = vpack.c.b16 %v995, %v993
    %v1116 = vpack.c.b16 %v998, %v996
    %v1117 = vpack.c.b16 %v999, %v997
    %v1118 = vpack.c.b16 %v1002, %v1000
    %v1119 = vpack.c.b16 %v1003, %v1001
    %v1120 = vpack.c.b16 %v1006, %v1004
    %v1121 = vpack.c.b16 %v1007, %v1005
    %v1122 = vpack.c.b16 %v1010, %v1008
    %v1123 = vpack.c.b16 %v1011, %v1009
    %v1124 = vpack.c.b16 %v1014, %v1012
    %v1125 = vpack.c.b16 %v1015, %v1013
    %v1126 = vpack.c.b16 %v1018, %v1016
    %v1127 = vpack.c.b16 %v1019, %v1017
    %v1128 = vpack.c.b16 %v1022, %v1020
    %v1129 = vpack.c.b16 %v1023, %v1021
    %v1130 = vpack.c.b16 %v1026, %v1024
    %v1131 = vpack.c.b16 %v1027, %v1025
    %v1132 = vpack.c.b16 %v1030, %v1028
    %v1133 = vpack.c.b16 %v1031, %v1029
    %v1134 = vpack.c.b16 %v1034, %v1032
    %v1135 = vpack.c.b16 %v1035, %v1033
    %v1136 = vpack.c.b16 %v1038, %v1036
    %v1137 = vpack.c.b16 %v1039, %v1037
    %v1138 = vpack.c.b16 %v1042, %v1040
    %v1139 = vpack.c.b16 %v1043, %v1041
    %1236 = vmatprep.subr.bf16.mxu0 %v1059
    %1237 = vmatpush1.bf16.msra.mxu0 %v1058
    %1238 = vmatprep.subr.bf16.mxu0 %v1057
    %1239 = vmatpush1.bf16.msra.mxu0 %v1056
    %1240 = vmatprep.subr.bf16.mxu0 %v1055
    %1241 = vmatpush1.bf16.msra.mxu0 %v1054
    %1242 = vmatprep.subr.bf16.mxu0 %v1053
    %1243 = vmatpush1.bf16.msra.mxu0 %v1052
    %1244 = vmatprep.subr.bf16.mxu0 %v1051
    %1245 = vmatpush1.bf16.msra.mxu0 %v1050
    %1246 = vmatprep.subr.bf16.mxu0 %v1049
    %1247 = vmatpush1.bf16.msra.mxu0 %v1048
    %1248 = vmatprep.subr.bf16.mxu0 %v1047
    %1249 = vmatpush1.bf16.msra.mxu0 %v1046
    %1250 = vmatprep.subr.bf16.mxu0 %v1045
    %1251 = vmatpush1.bf16.msra.mxu0 %v1044
    %1252 = vmatprep.subr.bf16.mxu0 %v1075
    %1253 = vmatpush2.bf16.msra.mxu0 %v1074
    %1254 = vmatprep.subr.bf16.mxu0 %v1073
    %1255 = vmatpush2.bf16.msra.mxu0 %v1072
    %1256 = vmatprep.subr.bf16.mxu0 %v1071
    %1257 = vmatpush2.bf16.msra.mxu0 %v1070
    %1258 = vmatprep.subr.bf16.mxu0 %v1069
    %1259 = vmatpush2.bf16.msra.mxu0 %v1068
    %1260 = vmatprep.subr.bf16.mxu0 %v1067
    %1261 = vmatpush2.bf16.msra.mxu0 %v1066
    %1262 = vmatprep.subr.bf16.mxu0 %v1065
    %1263 = vmatpush2.bf16.msra.mxu0 %v1064
    %1264 = vmatprep.subr.bf16.mxu0 %v1063
    %1265 = vmatpush2.bf16.msra.mxu0 %v1062
    %1266 = vmatprep.subr.bf16.mxu0 %v1061
    %1267 = vmatpush2.bf16.msra.mxu0 %v1060
    %1268 = vmatprep.mubr.bf16.mxu0 %v643
    %1269 = vmatmul.mubr.bf16.gmra.mxu0 %v642
    %v1270 = vpop.f32.mrf.mxu0
    %v1271 = vadd.f32 %v749, %v1270
    %v1272 = vpop.f32.mrf.mxu0
    %v1273 = vadd.f32 %v753, %v1272
    %v1274 = vpop.f32.mrf.mxu0
    %v1275 = vadd.f32 %v749, %v1274
    %v1276 = vpop.f32.mrf.mxu0
    %v1277 = vadd.f32 %v753, %v1276
    %1278 = vdwg.mxu0
    %1279 = vmatprep.subr.bf16.mxu0 %v1091
    %1280 = vmatpush1.bf16.msra.mxu0 %v1090
    %1281 = vmatprep.subr.bf16.mxu0 %v1089
    %1282 = vmatpush1.bf16.msra.mxu0 %v1088
    %1283 = vmatprep.subr.bf16.mxu0 %v1087
    %1284 = vmatpush1.bf16.msra.mxu0 %v1086
    %1285 = vmatprep.subr.bf16.mxu0 %v1085
    %1286 = vmatpush1.bf16.msra.mxu0 %v1084
    %1287 = vmatprep.subr.bf16.mxu0 %v1083
    %1288 = vmatpush1.bf16.msra.mxu0 %v1082
    %1289 = vmatprep.subr.bf16.mxu0 %v1081
    %1290 = vmatpush1.bf16.msra.mxu0 %v1080
    %1291 = vmatprep.subr.bf16.mxu0 %v1079
    %1292 = vmatpush1.bf16.msra.mxu0 %v1078
    %1293 = vmatprep.subr.bf16.mxu0 %v1077
    %1294 = vmatpush1.bf16.msra.mxu0 %v1076
    %1295 = vmatprep.subr.bf16.mxu0 %v1107
    %1296 = vmatpush2.bf16.msra.mxu0 %v1106
    %1297 = vmatprep.subr.bf16.mxu0 %v1105
    %1298 = vmatpush2.bf16.msra.mxu0 %v1104
    %1299 = vmatprep.subr.bf16.mxu0 %v1103
    %1300 = vmatpush2.bf16.msra.mxu0 %v1102
    %1301 = vmatprep.subr.bf16.mxu0 %v1101
    %1302 = vmatpush2.bf16.msra.mxu0 %v1100
    %1303 = vmatprep.subr.bf16.mxu0 %v1099
    %1304 = vmatpush2.bf16.msra.mxu0 %v1098
    %1305 = vmatprep.subr.bf16.mxu0 %v1097
    %1306 = vmatpush2.bf16.msra.mxu0 %v1096
    %1307 = vmatprep.subr.bf16.mxu0 %v1095
    %1308 = vmatpush2.bf16.msra.mxu0 %v1094
    %1309 = vmatprep.subr.bf16.mxu0 %v1093
    %1310 = vmatpush2.bf16.msra.mxu0 %v1092
    %1311 = vmatprep.mubr.bf16.mxu0 %v645
    %1312 = vmatmul.mubr.bf16.gmra.mxu0 %v644
    %v1313 = vpop.f32.mrf.mxu0
    %v1314 = vadd.f32 %v1271, %v1313
    %v1315 = vpop.f32.mrf.mxu0
    %v1316 = vadd.f32 %v1273, %v1315
    %v1317 = vpop.f32.mrf.mxu0
    %v1318 = vadd.f32 %v1275, %v1317
    %v1319 = vpop.f32.mrf.mxu0
    %v1320 = vadd.f32 %v1277, %v1319
    %1321 = vdwg.mxu0
    %1322 = vmatprep.subr.bf16.mxu0 %v1123
    %1323 = vmatpush1.bf16.msra.mxu0 %v1122
    %1324 = vmatprep.subr.bf16.mxu0 %v1121
    %1325 = vmatpush1.bf16.msra.mxu0 %v1120
    %1326 = vmatprep.subr.bf16.mxu0 %v1119
    %1327 = vmatpush1.bf16.msra.mxu0 %v1118
    %1328 = vmatprep.subr.bf16.mxu0 %v1117
    %1329 = vmatpush1.bf16.msra.mxu0 %v1116
    %1330 = vmatprep.subr.bf16.mxu0 %v1115
    %1331 = vmatpush1.bf16.msra.mxu0 %v1114
    %1332 = vmatprep.subr.bf16.mxu0 %v1113
    %1333 = vmatpush1.bf16.msra.mxu0 %v1112
    %1334 = vmatprep.subr.bf16.mxu0 %v1111
    %1335 = vmatpush1.bf16.msra.mxu0 %v1110
    %1336 = vmatprep.subr.bf16.mxu0 %v1109
    %1337 = vmatpush1.bf16.msra.mxu0 %v1108
    %1338 = vmatprep.subr.bf16.mxu0 %v1139
    %1339 = vmatpush2.bf16.msra.mxu0 %v1138
    %1340 = vmatprep.subr.bf16.mxu0 %v1137
    %1341 = vmatpush2.bf16.msra.mxu0 %v1136
    %1342 = vmatprep.subr.bf16.mxu0 %v1135
    %1343 = vmatpush2.bf16.msra.mxu0 %v1134
    %1344 = vmatprep.subr.bf16.mxu0 %v1133
    %1345 = vmatpush2.bf16.msra.mxu0 %v1132
    %1346 = vmatprep.subr.bf16.mxu0 %v1131
    %1347 = vmatpush2.bf16.msra.mxu0 %v1130
    %1348 = vmatprep.subr.bf16.mxu0 %v1129
    %1349 = vmatpush2.bf16.msra.mxu0 %v1128
    %1350 = vmatprep.subr.bf16.mxu0 %v1127
    %1351 = vmatpush2.bf16.msra.mxu0 %v1126
    %1352 = vmatprep.subr.bf16.mxu0 %v1125
    %1353 = vmatpush2.bf16.msra.mxu0 %v1124
    %1354 = vmatprep.mubr.bf16.mxu0 %v647
    %1355 = vmatmul.mubr.bf16.gmra.mxu0 %v646
    %v1356 = vpop.f32.mrf.mxu0
    %v1357 = vadd.f32 %v1314, %v1356
    %v1358 = vpop.f32.mrf.mxu0
    %v1359 = vadd.f32 %v1316, %v1358
    %v1360 = vpop.f32.mrf.mxu0
    %v1361 = vadd.f32 %v1318, %v1360
    %v1362 = vpop.f32.mrf.mxu0
    %v1363 = vadd.f32 %v1320, %v1362
    %1364 = vdwg.mxu0
    %1365 = vst [vmem:[#allocation2] sm:$0xff] %v1357
    %1366 = vst.msk [vmem:[#allocation2 + $0x8] sm:$0xff] %vm497, %v1359
    %1367 = vst [vmem:[#allocation2 + $0x10] sm:$0xff] %v1361
    %1368 = vst.msk [vmem:[#allocation2 + $0x18] sm:$0xff] %vm497, %v1363
    // Predicated region
    $region22: #{tpu_custom_call.1} parent=1 // pred_check
      _
    $region23: #{tpu_custom_call.1} parent=1 // pred_check_branch
      %1370 = sbr.rel (0) target = $region25
    $region24: #{tpu_custom_call.1} parent=1 // pred_region
      %s1372 = ssub.s32 512, 512
      %1373 = vsyncadd [#allocation3], %s1372
      %s1374 = sshll.u32 [#allocation2], 4
      %s1375 = int_to_ptr.vmem [resolvable:$true] %s1374
      %1380 = dma.vmem_to_hbm [thread:$0]  %s1375, 512, %s5, [#allocation3], 256, 256, 16
    $region25: #{tpu_custom_call.1} parent=1 // pred_fallthru
      _
    // Predicated region
    $region26: #{tpu_custom_call.1} parent=1 // pred_check
      _
    $region27: #{tpu_custom_call.1} parent=1 // pred_check_branch
      %1382 = sbr.rel (0) target = $region29
    $region28: #{tpu_custom_call.1} parent=1 // pred_region
      %1383 = dma.done [#allocation3], 512
    $region29: #{tpu_custom_call.1} parent=1 // pred_fallthru
      _
    %1384 = vsyncpa [#allocation3], 1

</llo_original>
